<compile_context>
chip_gen: v6e
topology: v6e:2x2x1
jax: 0.10.0
libtpu: 0.0.40
codegen_flags: <defaults>
</compile_context>

<pallas_src>
import functools
import math

import jax
import jax.numpy as jnp
from jax import lax
from jax.experimental import pallas as pl
from jax.experimental.pallas import tpu as pltpu

SIGMA = 25.0  # VE-SDE sigma_max used by marginal_prob_get_std


def _score_kernel(x_ref, w_ref, b_ref, t_ref, o_ref, *, log_sigma):
    k = pl.program_id(2)

    # --- compute_unnormalized_score (linear surrogate), MXU, f32 accumulate ----
    # Cast the x tile to bf16 in-kernel (no wrapper-side convert pass); W tile
    # already arrives in bf16. Accumulate directly into the resident f32 output
    # block (its index map ignores k), so no separate VMEM accumulator scratch.
    partial = jnp.dot(
        x_ref[...].astype(jnp.bfloat16), w_ref[...],
        preferred_element_type=jnp.float32,
    )

    @pl.when(k == 0)
    def _():
        o_ref[...] = partial

    @pl.when(k != 0)
    def _():
        o_ref[...] = o_ref[...] + partial

    # --- epilogue: bias + marginal_prob_get_std(t) + normalization -------------
    @pl.when(k == pl.num_programs(2) - 1)
    def _():
        # std(t) = sqrt((sigma^(2t) - 1) / (2 log sigma)); rsqrt on the EUP so
        # normalization is a multiply, not a VPU divide.
        # TODO(synk): std(t) -> 0 as t -> 0; production callers should clamp t.
        t = t_ref[...].astype(jnp.float32)                       # (tm, 1)
        std_arg = (jnp.exp((2.0 * log_sigma) * t) - 1.0) / (2.0 * log_sigma)
        inv_std = lax.rsqrt(std_arg)                             # (tm, 1), EUP

        h = o_ref[...] + b_ref[...].astype(jnp.float32)          # bias only once
        # reshape_std semantics: (tm, 1) broadcasts over the feature dim.
        o_ref[...] = (h * inv_std).astype(o_ref.dtype)


def _pick_tiles(B, D):
    """Tile selection: big lane-dense tiles, >=2 M programs for v7x's 2 TCs."""
    tn = min(256, D)          # 256 fills the v6e/v7x MXU width; native on v5e too.
    tk = min(512, D)          # large K tile -> fewer accumulator revisits.
    tm = min(512, B)
    # Keep at least 2 programs on the parallel M axis so both v7x TensorCores
    # get work even when the whole problem would fit in one grid step.
    if B // tm < 2 and B >= 16:
        tm = max(8, B // 2)
    return tm, tn, tk


def score_model_forward(x, t, w, b, *, tm=None, tn=None, tk=None):
    """ScoreModelBase.forward: unnormalized score / std(t).

    Args:
      x: [B, D] float32 input (input_field 'x').
      t: [B, 1] float32 diffusion time (input_dict['t']).
      w: [D, D] linear weight (surrogate score net); ideally stored as bf16.
      b: [1, D] float32 linear bias.
    Returns:
      dict with output_field 'grad_x_log_p_x' -> [B, D] float32.
    """
    B, D = x.shape

    atm, atn, atk = _pick_tiles(B, D)
    tm = atm if tm is None else min(tm, B)
    tn = atn if tn is None else min(tn, D)
    tk = atk if tk is None else min(tk, D)
    assert B % tm == 0 and D % tn == 0 and D % tk == 0, "shapes must tile evenly"

    log_sigma = math.log(SIGMA)  # host-side constant, no device round-trip

    # W is used in bf16 on the MXU; cast once here only if the caller didn't
    # already store it in bf16 (outside the per-step hot path). x stays f32 in
    # HBM and is cast per tile inside the kernel.
    w_lp = w if w.dtype == jnp.bfloat16 else w.astype(jnp.bfloat16)
    t2 = t.reshape(B, 1).astype(jnp.float32)
    b2 = b.reshape(1, D).astype(jnp.float32)

    grid = (B // tm, D // tn, D // tk)

    # Explicit VMEM budget (double-buffered inputs + output block), capped well
    # under v7x's 64 MiB per-TC VMEM.
    footprint = 2 * (tm * tk * 4        # x tile (f32)
                     + tk * tn * 2      # w tile (bf16)
                     + tn * 4           # bias slice
                     + tm * 4           # t slice
                     + tm * tn * 4)     # output block (f32, accumulator)
    vmem_limit = min(max(footprint + (16 << 20), 32 << 20), 48 << 20)

    out = pl.pallas_call(
        functools.partial(_score_kernel, log_sigma=log_sigma),
        out_shape=jax.ShapeDtypeStruct((B, D), jnp.float32),
        grid_spec=pltpu.PrefetchScalarGridSpec(
            num_scalar_prefetch=0,
            grid=grid,
            in_specs=[
                pl.BlockSpec((tm, tk), lambda i, j, k: (i, k)),   # x tile (f32)
                pl.BlockSpec((tk, tn), lambda i, j, k: (k, j)),   # w tile (bf16)
                pl.BlockSpec((1, tn), lambda i, j, k: (0, j)),    # bias slice
                pl.BlockSpec((tm, 1), lambda i, j, k: (i, 0)),    # t slice (per M tile)
            ],
            out_specs=pl.BlockSpec((tm, tn), lambda i, j, k: (i, j)),
        ),
        compiler_params=pltpu.CompilerParams(
            # M/N parallel (2-TC sharding on v7x), K is the reduction axis.
            dimension_semantics=("parallel", "parallel", "arbitrary"),
            vmem_limit_bytes=vmem_limit,
        ),
    )(x, w_lp, b2, t2)

    return {"grad_x_log_p_x": out}


def reference_forward(x, t, w, b):
    """Pure-JAX reference matching the PyTorch semantics (same bf16 matmul)."""
    h = jnp.dot(
        x.astype(jnp.bfloat16), w.astype(jnp.bfloat16),
        preferred_element_type=jnp.float32,
    ) + b
    log_sigma = math.log(SIGMA)
    std = jnp.sqrt((jnp.exp(2.0 * t * log_sigma) - 1.0) / (2.0 * log_sigma))
    return h / std  # std is [B, 1] == reshape_std output for a [B, D] score


if __name__ == "__main__":
    # Lane-dense small shapes: batch=256, input_dim=256. With the new tile
    # defaults this runs as grid=(2, 1, 1): W streamed once, 2 M programs so
    # both v7x TensorCores have work, unmasked full-lane stores.
    B, D = 256, 256

    key = jax.random.PRNGKey(0)
    kx, kt, kw, kb = jax.random.split(key, 4)

    x = jax.random.normal(kx, (B, D), dtype=jnp.float32)
    # t in (0, 1], bounded away from 0 so std(t) stays finite.
    t = jax.random.uniform(kt, (B, 1), dtype=jnp.float32, minval=0.05, maxval=1.0)
    # Deterministic parameter init for the surrogate linear score net.
    w = jax.random.normal(kw, (D, D), dtype=jnp.float32) * (1.0 / math.sqrt(D))
    b = jax.random.normal(kb, (1, D), dtype=jnp.float32) * 0.01

    # Persist the weight in bf16 (cast once, outside the forward hot path).
    w_bf16 = w.astype(jnp.bfloat16)

    out_dict = score_model_forward(x, t, w_bf16, b)
    out = jax.block_until_ready(out_dict["grad_x_log_p_x"])

    ref = reference_forward(x, t, w, b)
    assert out.shape == (B, D)
    assert jnp.allclose(out, ref, atol=5e-3, rtol=5e-3), "mismatch vs reference"

    print("KERNEL_OK")
</pallas_src>

<mosaic_0001>
module attributes {stable_mosaic.version = 11 : i64} {
  func.func @_score_kernel(%arg0: i32, %arg1: i32, %arg2: i32, %arg3: memref<128x256xf32, #tpu.memory_space<vmem>>, %arg4: memref<256x256xbf16, #tpu.memory_space<vmem>>, %arg5: memref<1x256xf32, #tpu.memory_space<vmem>>, %arg6: memref<128x1xf32, #tpu.memory_space<vmem>>, %arg7: memref<128x256xf32, #tpu.memory_space<vmem>>) attributes {dimension_semantics = [#tpu.dimension_semantics<parallel>, #tpu.dimension_semantics<parallel>, #tpu.dimension_semantics<arbitrary>], iteration_bounds = array<i64: 2, 1, 1>, scalar_prefetch = 0 : i64, scratch_operands = 0 : i64, tpu.core_type = #tpu.core_type<tc>, window_params = [{transform_indices = @transform_0, window_bounds = array<i64: 128, 256>}, {transform_indices = @transform_1, window_bounds = array<i64: 256, 256>}, {transform_indices = @transform_2, window_bounds = array<i64: 1, 256>}, {transform_indices = @transform_3, window_bounds = array<i64: 128, 1>}, {transform_indices = @transform_4, window_bounds = array<i64: 128, 256>}]} {
    %c0 = arith.constant 0 : index
    %c0_0 = arith.constant 0 : index
    %0 = vector.load %arg3[%c0, %c0_0] : memref<128x256xf32, #tpu.memory_space<vmem>>, vector<128x256xf32>
    %1 = arith.truncf %0 : vector<128x256xf32> to vector<128x256xbf16>
    %c0_1 = arith.constant 0 : index
    %c0_2 = arith.constant 0 : index
    %2 = vector.load %arg4[%c0_1, %c0_2] : memref<256x256xbf16, #tpu.memory_space<vmem>>, vector<256x256xbf16>
    %cst = arith.constant dense<0.000000e+00> : vector<128x256xf32>
    %3 = tpu.matmul %1, %2, %cst {dimension_numbers = #tpu.dot_dimension_numbers<[1], [0], [0], [1], [0, 0, 1, 1], [], []>} : vector<128x256xbf16>, vector<256x256xbf16>, vector<128x256xf32> -> vector<128x256xf32>
    %c0_i32 = arith.constant 0 : i32
    %4 = arith.cmpi eq, %arg2, %c0_i32 : i32
    %5 = arith.extui %4 : i1 to i32
    %c0_i32_3 = arith.constant 0 : i32
    %6 = arith.cmpi ne, %5, %c0_i32_3 : i32
    scf.if %6 {
      %c0_8 = arith.constant 0 : index
      %c0_9 = arith.constant 0 : index
      %13 = vector.load %arg7[%c0_8, %c0_9] : memref<128x256xf32, #tpu.memory_space<vmem>>, vector<128x256xf32>
      tpu.vector_store %arg7[%c0_8, %c0_9], %3 {strides = array<i32>} : memref<128x256xf32, #tpu.memory_space<vmem>>, vector<128x256xf32>,
    } else {
    }
    %c0_i32_4 = arith.constant 0 : i32
    %7 = arith.cmpi ne, %arg2, %c0_i32_4 : i32
    %8 = arith.extui %7 : i1 to i32
    %c0_i32_5 = arith.constant 0 : i32
    %9 = arith.cmpi ne, %8, %c0_i32_5 : i32
    scf.if %9 {
      %c0_8 = arith.constant 0 : index
      %c0_9 = arith.constant 0 : index
      %13 = vector.load %arg7[%c0_8, %c0_9] : memref<128x256xf32, #tpu.memory_space<vmem>>, vector<128x256xf32>
      %14 = arith.addf %13, %3 : vector<128x256xf32>
      %c0_10 = arith.constant 0 : index
      %c0_11 = arith.constant 0 : index
      %15 = vector.load %arg7[%c0_10, %c0_11] : memref<128x256xf32, #tpu.memory_space<vmem>>, vector<128x256xf32>
      tpu.vector_store %arg7[%c0_10, %c0_11], %14 {strides = array<i32>} : memref<128x256xf32, #tpu.memory_space<vmem>>, vector<128x256xf32>,
    } else {
    }
    %c0_i32_6 = arith.constant 0 : i32
    %10 = arith.cmpi eq, %arg2, %c0_i32_6 : i32
    %11 = arith.extui %10 : i1 to i32
    %c0_i32_7 = arith.constant 0 : i32
    %12 = arith.cmpi ne, %11, %c0_i32_7 : i32
    scf.if %12 {
      %c0_8 = arith.constant 0 : index
      %c0_9 = arith.constant 0 : index
      %13 = vector.load %arg6[%c0_8, %c0_9] : memref<128x1xf32, #tpu.memory_space<vmem>>, vector<128x1xf32>
      %cst_10 = arith.constant 6.43775177 : f32
      %14 = vector.broadcast %cst_10 : f32 to vector<128x1xf32>
      %15 = arith.mulf %14, %13 : vector<128x1xf32>
      %16 = math.exp %15 : vector<128x1xf32>
      %cst_11 = arith.constant 1.000000e+00 : f32
      %17 = vector.broadcast %cst_11 : f32 to vector<128x1xf32>
      %18 = arith.subf %16, %17 : vector<128x1xf32>
      %cst_12 = arith.constant 6.43775177 : f32
      %19 = vector.broadcast %cst_12 : f32 to vector<128x1xf32>
      %20 = arith.divf %18, %19 : vector<128x1xf32>
      %21 = math.rsqrt %20 : vector<128x1xf32>
      %c0_13 = arith.constant 0 : index
      %c0_14 = arith.constant 0 : index
      %22 = vector.load %arg7[%c0_13, %c0_14] : memref<128x256xf32, #tpu.memory_space<vmem>>, vector<128x256xf32>
      %c0_15 = arith.constant 0 : index
      %c0_16 = arith.constant 0 : index
      %23 = vector.load %arg5[%c0_15, %c0_16] : memref<1x256xf32, #tpu.memory_space<vmem>>, vector<1x256xf32>
      %24 = vector.broadcast %23 : vector<1x256xf32> to vector<128x256xf32>
      %25 = arith.addf %22, %24 : vector<128x256xf32>
      %26 = vector.broadcast %21 : vector<128x1xf32> to vector<128x256xf32>
      %27 = arith.mulf %25, %26 : vector<128x256xf32>
      %c0_17 = arith.constant 0 : index
      %c0_18 = arith.constant 0 : index
      %28 = vector.load %arg7[%c0_17, %c0_18] : memref<128x256xf32, #tpu.memory_space<vmem>>, vector<128x256xf32>
      tpu.vector_store %arg7[%c0_17, %c0_18], %27 {strides = array<i32>} : memref<128x256xf32, #tpu.memory_space<vmem>>, vector<128x256xf32>,
    } else {
    }
    return
  }
  func.func @transform_0(%arg0: i32, %arg1: i32, %arg2: i32) -> (i32, i32) {
    %c0_i32 = arith.constant 0 : i32
    return %arg0, %arg2 : i32, i32
  }
  func.func @transform_1(%arg0: i32, %arg1: i32, %arg2: i32) -> (i32, i32) {
    %c0_i32 = arith.constant 0 : i32
    return %arg2, %arg1 : i32, i32
  }
  func.func @transform_2(%arg0: i32, %arg1: i32, %arg2: i32) -> (i32, i32) {
    %c0_i32 = arith.constant 0 : i32
    %c0_i32_0 = arith.constant 0 : i32
    return %c0_i32, %arg1 : i32, i32
  }
  func.func @transform_3(%arg0: i32, %arg1: i32, %arg2: i32) -> (i32, i32) {
    %c0_i32 = arith.constant 0 : i32
    %c0_i32_0 = arith.constant 0 : i32
    return %arg0, %c0_i32 : i32, i32
  }
  func.func @transform_4(%arg0: i32, %arg1: i32, %arg2: i32) -> (i32, i32) {
    %c0_i32 = arith.constant 0 : i32
    return %arg0, %arg1 : i32, i32
  }
}

</mosaic_0001>

<llo_original>
// kernel: tpu_custom_call.1
$region0: #{tpu_custom_call.1}
  #allocation0 [shape = 'u32[]', space=smem, size = 0x4, offset = 0x4, fixed_abs, tag = 'smem constant byte address 0x4 - core index']
  #allocation1 [shape = 'u32[144,128]{1,0:T(1,128)}', space=vmem, size = 0x12000, scoped, tag = 'internal scratch']
  %s0 = inlined_call_operand.hbm [shape: f32[256,256], index: 0, kind: input, shape index: {}]
  %s1 = inlined_call_operand.vmem [shape: bf16[256,256], index: 1, kind: input, shape index: {}]
  %s2 = inlined_call_operand.vmem [shape: f32[1,256], index: 2, kind: input, shape index: {}]
  %s3 = inlined_call_operand.vmem [shape: f32[256,1], index: 3, kind: input, shape index: {}]
  %s4 = inlined_call_operand.hbm [shape: f32[256,256], index: 4, kind: output, shape index: {}]
  %s5 = sld [smem:[#allocation0]]
  $region65: #{tpu_custom_call.1} parent=0
    _
  %s7 = ssub.s32 1, %s5
  %s8 = scalar_select 0, %s7, %s5
  $region1: #{tpu_custom_call.1} parent=0
    #allocation2 [shape = 'u8[262144]{0}', space=vmem, size = 0x40000, scoped, tag = 'input window, operand 0']
    #allocation3 [shape = 's32[2]{0}', space=sflag, size = 0x8, scoped, tag = 'scoped memory for tpu_custom_call.1']
    #allocation4 [shape = 's32[2]{0}', space=sflag, size = 0x8, scoped, tag = 'scoped memory for tpu_custom_call.1']
    #allocation5 [shape = 'u8[262144]{0}', space=vmem, size = 0x40000, scoped, tag = 'output window, operand 0']
    %9 = vsyncpa [#allocation3], 0
    %s10 = scalar_lea.sflag [#allocation3], 1
    %11 = vsyncpa %s10, 0
    %12 = vsyncpa [#allocation4], 0
    %s13 = scalar_lea.sflag [#allocation4], 1
    %14 = vsyncpa %s13, 0
    loop: start=0, step=1, limit=4
    $region2: #{tpu_custom_call.1} parent=1 // loop_pre_header
      _
    $region3: #{tpu_custom_call.1} parent=1 // loop_header
      %s16 = sphi 0, %s20
      %p17 = scmp.ge.s32.totalorder %s16, 4
      %s23 = sphi 0, %s42
      %s24 = sphi 0, %s38
      %s25 = sphi 0, %s34
      %s26 = sphi 0, %s23
      %s27 = sphi 0, %s24
      %s28 = sphi 0, %s25
      %s29 = sphi 0, %s26
      %s30 = sphi 0, %s27
      %s31 = sphi 0, %s28
      %s47 = sphi 0, %s49
      %s50 = sphi 0, %s47
      %s51 = sphi 0, %s50
      %s67 = sphi 0, %s51
      %s75 = sphi 0, %s77
      %s78 = sphi 0, %s75
      %s79 = sphi 0, %s78
      %s95 = sphi 0, %s79
      %s101 = sphi 0, %s103
      %s104 = sphi 0, %s101
      %s105 = sphi 0, %s104
      %s121 = sphi 0, %s105
      %s127 = sphi 0, %s129
      %s130 = sphi 0, %s127
      %s131 = sphi 0, %s130
      %s147 = sphi 0, %s131
      %s155 = sphi 0, %s157
      %s158 = sphi 0, %s155
      %s159 = sphi 0, %s158
      %s175 = sphi 0, %s159
    $region4: #{tpu_custom_call.1} parent=1 // loop_header_branch
      %19 = sbr.rel (%p17) target = $region8
    $region5: #{tpu_custom_call.1} parent=1 // loop_body
      %s21 = ssub.s32 %s16, 1
      %s22 = ssub.s32 %s16, 2
      %s32 = sadd.s32 1, %s25
      %p33 = scmp.ge.s32.totalorder %s32, 1
      %s34 = scalar_select %p33, 0, %s32
      %s35 = sadd.s32 1, %s24
      %s36 = scalar_select %p33, %s35, %s24
      %p37 = scmp.ge.s32.totalorder %s36, 1
      %s38 = scalar_select %p37, 0, %s36
      %s39 = sadd.s32 1, %s23
      %s40 = scalar_select %p37, %s39, %s23
      %p41 = scmp.ge.s32.totalorder %s40, 2
      %s42 = scalar_select %p41, 0, %s40
      %s43 = ssub.s32 %s23, %s42
      %s44 = ssub.s32 %s25, %s34
      %s45 = sor.u32 %s43, %s44
      %p46 = scmp.eq.s32.totalorder %s45, 0
      %s48 = sadd.s32 %s47, 1
      %s49 = scalar_select %p46, %s47, %s48
      %p52 = pneg %p46
      %p53 = scmp.eq.s32.totalorder %s16, 1
      %p54 = por %p52, %p53
      %p55 = scmp.ne.s32.totalorder %s47, %s50
      %p56 = scmp.eq.s32.totalorder %s16, 0
      %p57 = por %p55, %p56
      %p58 = scmp.ne.s32.totalorder %s47, %s50
      %p59 = scmp.eq.s32.totalorder %s21, 1
      %p60 = por %p58, %p59
      %p61 = scmp.ne.s32.totalorder %s50, %s51
      %p62 = scmp.eq.s32.totalorder %s21, 0
      %p63 = por %p61, %p62
      %p64 = scmp.ne.s32.totalorder %s50, %s51
      %p65 = scmp.eq.s32.totalorder %s22, 1
      %p66 = por %p64, %p65
      %p68 = scmp.ne.s32.totalorder %s51, %s67
      %p69 = scmp.eq.s32.totalorder %s22, 0
      %p70 = por %p68, %p69
      %s71 = ssub.s32 %s25, %s34
      %s72 = ssub.s32 %s24, %s38
      %s73 = sor.u32 %s71, %s72
      %p74 = scmp.eq.s32.totalorder %s73, 0
      %s76 = sadd.s32 %s75, 1
      %s77 = scalar_select %p74, %s75, %s76
      %p80 = pneg %p74
      %p81 = scmp.eq.s32.totalorder %s16, 1
      %p82 = por %p80, %p81
      %p83 = scmp.ne.s32.totalorder %s75, %s78
      %p84 = scmp.eq.s32.totalorder %s16, 0
      %p85 = por %p83, %p84
      %p86 = scmp.ne.s32.totalorder %s75, %s78
      %p87 = scmp.eq.s32.totalorder %s21, 1
      %p88 = por %p86, %p87
      %p89 = scmp.ne.s32.totalorder %s78, %s79
      %p90 = scmp.eq.s32.totalorder %s21, 0
      %p91 = por %p89, %p90
      %p92 = scmp.ne.s32.totalorder %s78, %s79
      %p93 = scmp.eq.s32.totalorder %s22, 1
      %p94 = por %p92, %p93
      %p96 = scmp.ne.s32.totalorder %s79, %s95
      %p97 = scmp.eq.s32.totalorder %s22, 0
      %p98 = por %p96, %p97
      %s99 = ssub.s32 %s24, %s38
      %p100 = scmp.eq.s32.totalorder %s99, 0
      %s102 = sadd.s32 %s101, 1
      %s103 = scalar_select %p100, %s101, %s102
      %p106 = pneg %p100
      %p107 = scmp.eq.s32.totalorder %s16, 1
      %p108 = por %p106, %p107
      %p109 = scmp.ne.s32.totalorder %s101, %s104
      %p110 = scmp.eq.s32.totalorder %s16, 0
      %p111 = por %p109, %p110
      %p112 = scmp.ne.s32.totalorder %s101, %s104
      %p113 = scmp.eq.s32.totalorder %s21, 1
      %p114 = por %p112, %p113
      %p115 = scmp.ne.s32.totalorder %s104, %s105
      %p116 = scmp.eq.s32.totalorder %s21, 0
      %p117 = por %p115, %p116
      %p118 = scmp.ne.s32.totalorder %s104, %s105
      %p119 = scmp.eq.s32.totalorder %s22, 1
      %p120 = por %p118, %p119
      %p122 = scmp.ne.s32.totalorder %s105, %s121
      %p123 = scmp.eq.s32.totalorder %s22, 0
      %p124 = por %p122, %p123
      %s125 = ssub.s32 %s23, %s42
      %p126 = scmp.eq.s32.totalorder %s125, 0
      %s128 = sadd.s32 %s127, 1
      %s129 = scalar_select %p126, %s127, %s128
      %p132 = pneg %p126
      %p133 = scmp.eq.s32.totalorder %s16, 1
      %p134 = por %p132, %p133
      %p135 = scmp.ne.s32.totalorder %s127, %s130
      %p136 = scmp.eq.s32.totalorder %s16, 0
      %p137 = por %p135, %p136
      %p138 = scmp.ne.s32.totalorder %s127, %s130
      %p139 = scmp.eq.s32.totalorder %s21, 1
      %p140 = por %p138, %p139
      %p141 = scmp.ne.s32.totalorder %s130, %s131
      %p142 = scmp.eq.s32.totalorder %s21, 0
      %p143 = por %p141, %p142
      %p144 = scmp.ne.s32.totalorder %s130, %s131
      %p145 = scmp.eq.s32.totalorder %s22, 1
      %p146 = por %p144, %p145
      %p148 = scmp.ne.s32.totalorder %s131, %s147
      %p149 = scmp.eq.s32.totalorder %s22, 0
      %p150 = por %p148, %p149
      %s151 = ssub.s32 %s23, %s42
      %s152 = ssub.s32 %s24, %s38
      %s153 = sor.u32 %s151, %s152
      %p154 = scmp.eq.s32.totalorder %s153, 0
      %s156 = sadd.s32 %s155, 1
      %s157 = scalar_select %p154, %s155, %s156
      %p160 = pneg %p154
      %p161 = scmp.eq.s32.totalorder %s16, 1
      %p162 = por %p160, %p161
      %p163 = scmp.ne.s32.totalorder %s155, %s158
      %p164 = scmp.eq.s32.totalorder %s16, 0
      %p165 = por %p163, %p164
      %p166 = scmp.ne.s32.totalorder %s155, %s158
      %p167 = scmp.eq.s32.totalorder %s21, 1
      %p168 = por %p166, %p167
      %p169 = scmp.ne.s32.totalorder %s158, %s159
      %p170 = scmp.eq.s32.totalorder %s21, 0
      %p171 = por %p169, %p170
      %p172 = scmp.ne.s32.totalorder %s158, %s159
      %p173 = scmp.eq.s32.totalorder %s22, 1
      %p174 = por %p172, %p173
      %p176 = scmp.ne.s32.totalorder %s159, %s175
      %p177 = scmp.eq.s32.totalorder %s22, 0
      %p178 = por %p176, %p177
      %p179 = scmp.le.s32.totalorder 1, %s16
      %p180 = scmp.lt.s32.totalorder %s16, 3
      %p181 = pnand %p179, %p180
      %p182 = pneg %p181
      // Predicated region
      $region9: #{tpu_custom_call.1} parent=5 // pred_check
        _
      $region10: #{tpu_custom_call.1} parent=5 // pred_check_branch
        %184 = sbr.rel (%p181) target = $region12
      $region11: #{tpu_custom_call.1} parent=5 // pred_region
        %s185 = ssub.s32 %s16, 1
        // Predicated region
        $region13: #{tpu_custom_call.1} parent=11 // pred_check
          %p186 = pneg %p91
        $region14: #{tpu_custom_call.1} parent=11 // pred_check_branch
          %188 = sbr.rel (%p186) target = $region16
        $region15: #{tpu_custom_call.1} parent=11 // pred_region
          %s189 = smul.u32 32, %s28
          %s190 = smul.u32 2, %s27
          %p191 = scmp.lt.s32.totalorder %s189, 31
          %s192 = scalar_select %p191, %s189, 31
          %p193 = scmp.lt.s32.totalorder %s190, 1
          %s194 = scalar_select %p193, %s190, 1
          %s195 = smul.addr %s192, 2
          %s196 = sadd.s32 %s194, %s195
          %s197 = smul.addr %s196, 4
          %s198 = scalar_lea.vmem %s1, %s197
          %s199 = smul.u32 32, %s28
          %s200 = smul.u32 2, %s27
        $region16: #{tpu_custom_call.1} parent=11 // pred_fallthru
          _
        // Predicated region
        $region17: #{tpu_custom_call.1} parent=11 // pred_check
          %p201 = pneg %p117
        $region18: #{tpu_custom_call.1} parent=11 // pred_check_branch
          %203 = sbr.rel (%p201) target = $region20
        $region19: #{tpu_custom_call.1} parent=11 // pred_region
          %s204 = smul.u32 2, %s27
          %p205 = scmp.lt.s32.totalorder %s204, 1
          %s206 = scalar_select %p205, %s204, 1
          %s207 = scalar_lea.vmem %s2, %s206
          %s208 = smul.u32 2, %s27
        $region20: #{tpu_custom_call.1} parent=11 // pred_fallthru
          _
      $region12: #{tpu_custom_call.1} parent=5 // pred_fallthru
        _
      %p209 = scmp.lt.s32.totalorder %s16, 2
      // Predicated region
      $region21: #{tpu_custom_call.1} parent=5 // pred_check
        %p210 = pneg %p209
      $region22: #{tpu_custom_call.1} parent=5 // pred_check_branch
        %212 = sbr.rel (%p210) target = $region24
      $region23: #{tpu_custom_call.1} parent=5 // pred_region
        // Predicated region
        $region25: #{tpu_custom_call.1} parent=23 // pred_check
          %p213 = pneg %p57
        $region26: #{tpu_custom_call.1} parent=23 // pred_check_branch
          %215 = sbr.rel (%p213) target = $region28
        $region27: #{tpu_custom_call.1} parent=23 // pred_region
          %s216 = sand.u32 %s47, 1
          %s217 = scalar_lea.sflag [#allocation3], %s216
          %s218 = sand.u32 %s47, 1
          %s219 = smul.addr %s218, 256
          %s220 = scalar_lea.vmem [#allocation2], %s219
          %s221 = smul.u32 16, %s23
          %s222 = smul.u32 2, %s25
          %s224 = ssub.s32 4096, 4096
          %225 = vsyncadd %s217, %s224
          %s226 = smul.addr %s221, 2
          %s227 = sadd.s32 %s222, %s226
          %s228 = smul.addr %s227, 128
          %s229 = scalar_lea.hbm %s0, %s228
          %s230 = sshll.u32 %s220, 4
          %s231 = int_to_ptr.vmem [resolvable:$true] %s230
          %236 = dma.hbm_to_vmem [thread:$0]  %s229, 4096, %s231, %s217, 256, 256, 16
        $region28: #{tpu_custom_call.1} parent=23 // pred_fallthru
          _
        // Predicated region
        $region29: #{tpu_custom_call.1} parent=23 // pred_check
          %p237 = pneg %p137
        $region30: #{tpu_custom_call.1} parent=23 // pred_check_branch
          %239 = sbr.rel (%p237) target = $region32
        $region31: #{tpu_custom_call.1} parent=23 // pred_region
          %s240 = smul.u32 16, %s23
          %p241 = scmp.lt.s32.totalorder %s240, 31
          %s242 = scalar_select %p241, %s240, 31
          %s243 = smul.addr %s242, 8
          %s244 = scalar_lea.vmem %s3, %s243
          %s245 = smul.u32 16, %s23
        $region32: #{tpu_custom_call.1} parent=23 // pred_fallthru
          _
      $region24: #{tpu_custom_call.1} parent=5 // pred_fallthru
        _
      %p246 = scmp.le.s32.totalorder 1, %s16
      %p247 = scmp.lt.s32.totalorder %s16, 3
      %p248 = pnand %p246, %p247
      %p249 = pneg %p248
      // Predicated region
      $region33: #{tpu_custom_call.1} parent=5 // pred_check
        _
      $region34: #{tpu_custom_call.1} parent=5 // pred_check_branch
        %251 = sbr.rel (%p248) target = $region36
      $region35: #{tpu_custom_call.1} parent=5 // pred_region
        %s252 = ssub.s32 %s16, 1
        %s253 = sand.u32 %s50, 1
        %s254 = scalar_lea.sflag [#allocation3], %s253
        %s255 = sand.u32 %s50, 1
        %s256 = smul.addr %s255, 256
        %s257 = scalar_lea.vmem [#allocation2], %s256
        // Predicated region
        $region37: #{tpu_custom_call.1} parent=35 // pred_check
          %p258 = pneg %p63
        $region38: #{tpu_custom_call.1} parent=35 // pred_check_branch
          %260 = sbr.rel (%p258) target = $region40
        $region39: #{tpu_custom_call.1} parent=35 // pred_region
          %261 = dma.done %s254, 4096
        $region40: #{tpu_custom_call.1} parent=35 // pred_fallthru
          _
        %s262 = sand.u32 %s50, 1
        %s263 = scalar_lea.sflag [#allocation3], %s262
        %s264 = sand.u32 %s50, 1
        %s265 = smul.addr %s264, 256
        %s266 = scalar_lea.vmem [#allocation2], %s265
        %p267 = pneg %p63
        %p268 = pneg %p60
        %s269 = smul.u32 32, %s28
        %s270 = smul.u32 2, %s27
        %p271 = scmp.lt.s32.totalorder %s269, 31
        %s272 = scalar_select %p271, %s269, 31
        %p273 = scmp.lt.s32.totalorder %s270, 1
        %s274 = scalar_select %p273, %s270, 1
        %s275 = smul.addr %s272, 2
        %s276 = sadd.s32 %s274, %s275
        %s277 = smul.addr %s276, 4
        %s278 = scalar_lea.vmem %s1, %s277
        %p279 = pneg %p91
        %p280 = pneg %p88
        %s281 = smul.u32 2, %s27
        %p282 = scmp.lt.s32.totalorder %s281, 1
        %s283 = scalar_select %p282, %s281, 1
        %s284 = scalar_lea.vmem %s2, %s283
        %p285 = pneg %p117
        %p286 = pneg %p114
        %s287 = smul.u32 16, %s26
        %p288 = scmp.lt.s32.totalorder %s287, 31
        %s289 = scalar_select %p288, %s287, 31
        %s290 = smul.addr %s289, 8
        %s291 = scalar_lea.vmem %s3, %s290
        %p292 = pneg %p143
        %p293 = pneg %p140
        %p294 = pneg %p171
        %p295 = pneg %p168
        %s296 = sand.u32 %s158, 1
        %s297 = scalar_lea.sflag [#allocation4], %s296
        %s298 = sand.u32 %s158, 1
        %s299 = smul.addr %s298, 256
        %s300 = scalar_lea.vmem [#allocation5], %s299
        %s301 = smul.u32 16, %s26
        %s302 = smul.u32 2, %s28
        %s303 = smul.u32 32, %s28
        %s304 = smul.u32 2, %s27
        %p305 = scmp.lt.s32.totalorder %s303, 31
        %s306 = scalar_select %p305, %s303, 31
        %p307 = scmp.lt.s32.totalorder %s304, 1
        %s308 = scalar_select %p307, %s304, 1
        %s309 = smul.addr %s306, 2
        %s310 = sadd.s32 %s308, %s309
        %s311 = smul.addr %s310, 4
        %s312 = scalar_lea.vmem %s1, %s311
        %s313 = smul.u32 32, %s28
        %s314 = smul.u32 2, %s27
        %s315 = smul.u32 2, %s27
        %p316 = scmp.lt.s32.totalorder %s315, 1
        %s317 = scalar_select %p316, %s315, 1
        %s318 = scalar_lea.vmem %s2, %s317
        %s319 = smul.u32 2, %s27
        %s320 = smul.u32 16, %s26
        %p321 = scmp.lt.s32.totalorder %s320, 31
        %s322 = scalar_select %p321, %s320, 31
        %s323 = smul.addr %s322, 8
        %s324 = scalar_lea.vmem %s3, %s323
        %s325 = smul.u32 16, %s26
        %s326 = smul.u32 16, %s26
        %s327 = smul.u32 2, %s27
        %v328 = vld [vmem:[%s257] sm:$0xff]
        %v329 = vld [vmem:[%s257 + $0x8] sm:$0xff]
        %v330 = vld [vmem:[%s257 + $0x10] sm:$0xff]
        %v331 = vld [vmem:[%s257 + $0x18] sm:$0xff]
        %v332 = vld [vmem:[%s257 + $0x20] sm:$0xff]
        %v333 = vld [vmem:[%s257 + $0x28] sm:$0xff]
        %v334 = vld [vmem:[%s257 + $0x30] sm:$0xff]
        %v335 = vld [vmem:[%s257 + $0x38] sm:$0xff]
        %v336 = vld [vmem:[%s257 + $0x40] sm:$0xff]
        %v337 = vld [vmem:[%s257 + $0x48] sm:$0xff]
        %v338 = vld [vmem:[%s257 + $0x50] sm:$0xff]
        %v339 = vld [vmem:[%s257 + $0x58] sm:$0xff]
        %v340 = vld [vmem:[%s257 + $0x60] sm:$0xff]
        %v341 = vld [vmem:[%s257 + $0x68] sm:$0xff]
        %v342 = vld [vmem:[%s257 + $0x70] sm:$0xff]
        %v343 = vld [vmem:[%s257 + $0x78] sm:$0xff]
        %v344 = vld [vmem:[%s257 + $0x80] sm:$0xff]
        %v345 = vld [vmem:[%s257 + $0x88] sm:$0xff]
        %v346 = vld [vmem:[%s257 + $0x90] sm:$0xff]
        %v347 = vld [vmem:[%s257 + $0x98] sm:$0xff]
        %v348 = vld [vmem:[%s257 + $0xa0] sm:$0xff]
        %v349 = vld [vmem:[%s257 + $0xa8] sm:$0xff]
        %v350 = vld [vmem:[%s257 + $0xb0] sm:$0xff]
        %v351 = vld [vmem:[%s257 + $0xb8] sm:$0xff]
        %v352 = vld [vmem:[%s257 + $0xc0] sm:$0xff]
        %v353 = vld [vmem:[%s257 + $0xc8] sm:$0xff]
        %v354 = vld [vmem:[%s257 + $0xd0] sm:$0xff]
        %v355 = vld [vmem:[%s257 + $0xd8] sm:$0xff]
        %v356 = vld [vmem:[%s257 + $0xe0] sm:$0xff]
        %v357 = vld [vmem:[%s257 + $0xe8] sm:$0xff]
        %v358 = vld [vmem:[%s257 + $0xf0] sm:$0xff]
        %v359 = vld [vmem:[%s257 + $0xf8] sm:$0xff]
        %v360 = vpack.c.bf16 %v330, %v328
        %v361 = vpack.c.bf16 %v331, %v329
        %v362 = vpack.c.bf16 %v334, %v332
        %v363 = vpack.c.bf16 %v335, %v333
        %v364 = vpack.c.bf16 %v338, %v336
        %v365 = vpack.c.bf16 %v339, %v337
        %v366 = vpack.c.bf16 %v342, %v340
        %v367 = vpack.c.bf16 %v343, %v341
        %v368 = vpack.c.bf16 %v346, %v344
        %v369 = vpack.c.bf16 %v347, %v345
        %v370 = vpack.c.bf16 %v350, %v348
        %v371 = vpack.c.bf16 %v351, %v349
        %v372 = vpack.c.bf16 %v354, %v352
        %v373 = vpack.c.bf16 %v355, %v353
        %v374 = vpack.c.bf16 %v358, %v356
        %v375 = vpack.c.bf16 %v359, %v357
        %v376 = vld [vmem:[%s312] sm:$0xff]
        %v377 = vld [vmem:[%s312 + $0x8] sm:$0xff]
        %v378 = vld [vmem:[%s312 + $0x10] sm:$0xff]
        %v379 = vld [vmem:[%s312 + $0x18] sm:$0xff]
        %v380 = vld [vmem:[%s312 + $0x20] sm:$0xff]
        %v381 = vld [vmem:[%s312 + $0x28] sm:$0xff]
        %v382 = vld [vmem:[%s312 + $0x30] sm:$0xff]
        %v383 = vld [vmem:[%s312 + $0x38] sm:$0xff]
        %v384 = vld [vmem:[%s312 + $0x40] sm:$0xff]
        %v385 = vld [vmem:[%s312 + $0x48] sm:$0xff]
        %v386 = vld [vmem:[%s312 + $0x50] sm:$0xff]
        %v387 = vld [vmem:[%s312 + $0x58] sm:$0xff]
        %v388 = vld [vmem:[%s312 + $0x60] sm:$0xff]
        %v389 = vld [vmem:[%s312 + $0x68] sm:$0xff]
        %v390 = vld [vmem:[%s312 + $0x70] sm:$0xff]
        %v391 = vld [vmem:[%s312 + $0x78] sm:$0xff]
        %v392 = vld [vmem:[%s312 + $0x80] sm:$0xff]
        %v393 = vld [vmem:[%s312 + $0x88] sm:$0xff]
        %v394 = vld [vmem:[%s312 + $0x90] sm:$0xff]
        %v395 = vld [vmem:[%s312 + $0x98] sm:$0xff]
        %v396 = vld [vmem:[%s312 + $0xa0] sm:$0xff]
        %v397 = vld [vmem:[%s312 + $0xa8] sm:$0xff]
        %v398 = vld [vmem:[%s312 + $0xb0] sm:$0xff]
        %v399 = vld [vmem:[%s312 + $0xb8] sm:$0xff]
        %v400 = vld [vmem:[%s312 + $0xc0] sm:$0xff]
        %v401 = vld [vmem:[%s312 + $0xc8] sm:$0xff]
        %v402 = vld [vmem:[%s312 + $0xd0] sm:$0xff]
        %v403 = vld [vmem:[%s312 + $0xd8] sm:$0xff]
        %v404 = vld [vmem:[%s312 + $0xe0] sm:$0xff]
        %v405 = vld [vmem:[%s312 + $0xe8] sm:$0xff]
        %v406 = vld [vmem:[%s312 + $0xf0] sm:$0xff]
        %v407 = vld [vmem:[%s312 + $0xf8] sm:$0xff]
        %v440 = vunpack.c.l.b16 %v376
        %v441 = vunpack.c.h.b16 %v376
        %v442 = vunpack.c.l.b16 %v377
        %v443 = vunpack.c.h.b16 %v377
        %v444 = vunpack.c.l.b16 %v378
        %v445 = vunpack.c.h.b16 %v378
        %v446 = vunpack.c.l.b16 %v379
        %v447 = vunpack.c.h.b16 %v379
        %v448 = vunpack.c.l.b16 %v380
        %v449 = vunpack.c.h.b16 %v380
        %v450 = vunpack.c.l.b16 %v381
        %v451 = vunpack.c.h.b16 %v381
        %v452 = vunpack.c.l.b16 %v382
        %v453 = vunpack.c.h.b16 %v382
        %v454 = vunpack.c.l.b16 %v383
        %v455 = vunpack.c.h.b16 %v383
        %v456 = vunpack.c.l.b16 %v384
        %v457 = vunpack.c.h.b16 %v384
        %v458 = vunpack.c.l.b16 %v385
        %v459 = vunpack.c.h.b16 %v385
        %v460 = vunpack.c.l.b16 %v386
        %v461 = vunpack.c.h.b16 %v386
        %v462 = vunpack.c.l.b16 %v387
        %v463 = vunpack.c.h.b16 %v387
        %v464 = vunpack.c.l.b16 %v388
        %v465 = vunpack.c.h.b16 %v388
        %v466 = vunpack.c.l.b16 %v389
        %v467 = vunpack.c.h.b16 %v389
        %v468 = vunpack.c.l.b16 %v390
        %v469 = vunpack.c.h.b16 %v390
        %v470 = vunpack.c.l.b16 %v391
        %v471 = vunpack.c.h.b16 %v391
        %v472 = vunpack.c.l.b16 %v392
        %v473 = vunpack.c.h.b16 %v392
        %v474 = vunpack.c.l.b16 %v393
        %v475 = vunpack.c.h.b16 %v393
        %v476 = vunpack.c.l.b16 %v394
        %v477 = vunpack.c.h.b16 %v394
        %v478 = vunpack.c.l.b16 %v395
        %v479 = vunpack.c.h.b16 %v395
        %v480 = vunpack.c.l.b16 %v396
        %v481 = vunpack.c.h.b16 %v396
        %v482 = vunpack.c.l.b16 %v397
        %v483 = vunpack.c.h.b16 %v397
        %v484 = vunpack.c.l.b16 %v398
        %v485 = vunpack.c.h.b16 %v398
        %v486 = vunpack.c.l.b16 %v399
        %v487 = vunpack.c.h.b16 %v399
        %v488 = vunpack.c.l.b16 %v400
        %v489 = vunpack.c.h.b16 %v400
        %v490 = vunpack.c.l.b16 %v401
        %v491 = vunpack.c.h.b16 %v401
        %v492 = vunpack.c.l.b16 %v402
        %v493 = vunpack.c.h.b16 %v402
        %v494 = vunpack.c.l.b16 %v403
        %v495 = vunpack.c.h.b16 %v403
        %v496 = vunpack.c.l.b16 %v404
        %v497 = vunpack.c.h.b16 %v404
        %v498 = vunpack.c.l.b16 %v405
        %v499 = vunpack.c.h.b16 %v405
        %v500 = vunpack.c.l.b16 %v406
        %v501 = vunpack.c.h.b16 %v406
        %v502 = vunpack.c.l.b16 %v407
        %v503 = vunpack.c.h.b16 %v407
        %v504 = vpack.c.b16 %v442, %v440
        %v505 = vpack.c.b16 %v443, %v441
        %v506 = vpack.c.b16 %v446, %v444
        %v507 = vpack.c.b16 %v447, %v445
        %v508 = vpack.c.b16 %v450, %v448
        %v509 = vpack.c.b16 %v451, %v449
        %v510 = vpack.c.b16 %v454, %v452
        %v511 = vpack.c.b16 %v455, %v453
        %v512 = vpack.c.b16 %v458, %v456
        %v513 = vpack.c.b16 %v459, %v457
        %v514 = vpack.c.b16 %v462, %v460
        %v515 = vpack.c.b16 %v463, %v461
        %v516 = vpack.c.b16 %v466, %v464
        %v517 = vpack.c.b16 %v467, %v465
        %v518 = vpack.c.b16 %v470, %v468
        %v519 = vpack.c.b16 %v471, %v469
        %v520 = vpack.c.b16 %v474, %v472
        %v521 = vpack.c.b16 %v475, %v473
        %v522 = vpack.c.b16 %v478, %v476
        %v523 = vpack.c.b16 %v479, %v477
        %v524 = vpack.c.b16 %v482, %v480
        %v525 = vpack.c.b16 %v483, %v481
        %v526 = vpack.c.b16 %v486, %v484
        %v527 = vpack.c.b16 %v487, %v485
        %v528 = vpack.c.b16 %v490, %v488
        %v529 = vpack.c.b16 %v491, %v489
        %v530 = vpack.c.b16 %v494, %v492
        %v531 = vpack.c.b16 %v495, %v493
        %v532 = vpack.c.b16 %v498, %v496
        %v533 = vpack.c.b16 %v499, %v497
        %v534 = vpack.c.b16 %v502, %v500
        %v535 = vpack.c.b16 %v503, %v501
        %568 = vmatprep.subr.bf16.mxu0 %v519
        %569 = vmatpush1.bf16.msra.mxu0 %v518
        %570 = vmatprep.subr.bf16.mxu0 %v517
        %571 = vmatpush1.bf16.msra.mxu0 %v516
        %572 = vmatprep.subr.bf16.mxu0 %v515
        %573 = vmatpush1.bf16.msra.mxu0 %v514
        %574 = vmatprep.subr.bf16.mxu0 %v513
        %575 = vmatpush1.bf16.msra.mxu0 %v512
        %576 = vmatprep.subr.bf16.mxu0 %v511
        %577 = vmatpush1.bf16.msra.mxu0 %v510
        %578 = vmatprep.subr.bf16.mxu0 %v509
        %579 = vmatpush1.bf16.msra.mxu0 %v508
        %580 = vmatprep.subr.bf16.mxu0 %v507
        %581 = vmatpush1.bf16.msra.mxu0 %v506
        %582 = vmatprep.subr.bf16.mxu0 %v505
        %583 = vmatpush1.bf16.msra.mxu0 %v504
        %584 = vmatprep.subr.bf16.mxu0 %v535
        %585 = vmatpush2.bf16.msra.mxu0 %v534
        %586 = vmatprep.subr.bf16.mxu0 %v533
        %587 = vmatpush2.bf16.msra.mxu0 %v532
        %588 = vmatprep.subr.bf16.mxu0 %v531
        %589 = vmatpush2.bf16.msra.mxu0 %v530
        %590 = vmatprep.subr.bf16.mxu0 %v529
        %591 = vmatpush2.bf16.msra.mxu0 %v528
        %592 = vmatprep.subr.bf16.mxu0 %v527
        %593 = vmatpush2.bf16.msra.mxu0 %v526
        %594 = vmatprep.subr.bf16.mxu0 %v525
        %595 = vmatpush2.bf16.msra.mxu0 %v524
        %596 = vmatprep.subr.bf16.mxu0 %v523
        %597 = vmatpush2.bf16.msra.mxu0 %v522
        %598 = vmatprep.subr.bf16.mxu0 %v521
        %599 = vmatpush2.bf16.msra.mxu0 %v520
        %600 = vmatprep.mubr.bf16.mxu0 %v361
        %601 = vmatmul.mubr.bf16.gmra.mxu0 %v360
        %v602 = vpop.f32.mrf.mxu0
        %v603 = vadd.f32 0.0, %v602
        %v604 = vpop.f32.mrf.mxu0
        %v605 = vadd.f32 0.0, %v604
        %v606 = vpop.f32.mrf.mxu0
        %v607 = vadd.f32 0.0, %v606
        %v608 = vpop.f32.mrf.mxu0
        %v609 = vadd.f32 0.0, %v608
        %610 = vmatprep.mubr.bf16.mxu0 %v363
        %611 = vmatmul.mubr.bf16.gmra.mxu0 %v362
        %v612 = vpop.f32.mrf.mxu0
        %v613 = vadd.f32 0.0, %v612
        %v614 = vpop.f32.mrf.mxu0
        %v615 = vadd.f32 0.0, %v614
        %v616 = vpop.f32.mrf.mxu0
        %v617 = vadd.f32 0.0, %v616
        %v618 = vpop.f32.mrf.mxu0
        %v619 = vadd.f32 0.0, %v618
        %620 = vmatprep.mubr.bf16.mxu0 %v365
        %621 = vmatmul.mubr.bf16.gmra.mxu0 %v364
        %v622 = vpop.f32.mrf.mxu0
        %v623 = vadd.f32 0.0, %v622
        %v624 = vpop.f32.mrf.mxu0
        %v625 = vadd.f32 0.0, %v624
        %v626 = vpop.f32.mrf.mxu0
        %v627 = vadd.f32 0.0, %v626
        %v628 = vpop.f32.mrf.mxu0
        %v629 = vadd.f32 0.0, %v628
        %630 = vmatprep.mubr.bf16.mxu0 %v367
        %631 = vmatmul.mubr.bf16.gmra.mxu0 %v366
        %v632 = vpop.f32.mrf.mxu0
        %v633 = vadd.f32 0.0, %v632
        %v634 = vpop.f32.mrf.mxu0
        %v635 = vadd.f32 0.0, %v634
        %v636 = vpop.f32.mrf.mxu0
        %v637 = vadd.f32 0.0, %v636
        %v638 = vpop.f32.mrf.mxu0
        %v639 = vadd.f32 0.0, %v638
        %640 = vmatprep.mubr.bf16.mxu0 %v369
        %641 = vmatmul.mubr.bf16.gmra.mxu0 %v368
        %v642 = vpop.f32.mrf.mxu0
        %v643 = vadd.f32 0.0, %v642
        %v644 = vpop.f32.mrf.mxu0
        %v645 = vadd.f32 0.0, %v644
        %v646 = vpop.f32.mrf.mxu0
        %v647 = vadd.f32 0.0, %v646
        %v648 = vpop.f32.mrf.mxu0
        %v649 = vadd.f32 0.0, %v648
        %650 = vmatprep.mubr.bf16.mxu0 %v371
        %651 = vmatmul.mubr.bf16.gmra.mxu0 %v370
        %v652 = vpop.f32.mrf.mxu0
        %v653 = vadd.f32 0.0, %v652
        %v654 = vpop.f32.mrf.mxu0
        %v655 = vadd.f32 0.0, %v654
        %v656 = vpop.f32.mrf.mxu0
        %v657 = vadd.f32 0.0, %v656
        %v658 = vpop.f32.mrf.mxu0
        %v659 = vadd.f32 0.0, %v658
        %660 = vmatprep.mubr.bf16.mxu0 %v373
        %661 = vmatmul.mubr.bf16.gmra.mxu0 %v372
        %v662 = vpop.f32.mrf.mxu0
        %v663 = vadd.f32 0.0, %v662
        %v664 = vpop.f32.mrf.mxu0
        %v665 = vadd.f32 0.0, %v664
        %v666 = vpop.f32.mrf.mxu0
        %v667 = vadd.f32 0.0, %v666
        %v668 = vpop.f32.mrf.mxu0
        %v669 = vadd.f32 0.0, %v668
        %670 = vmatprep.mubr.bf16.mxu0 %v375
        %671 = vmatmul.mubr.bf16.gmra.mxu0 %v374
        %v672 = vpop.f32.mrf.mxu0
        %v673 = vadd.f32 0.0, %v672
        %v674 = vpop.f32.mrf.mxu0
        %v675 = vadd.f32 0.0, %v674
        %v676 = vpop.f32.mrf.mxu0
        %v677 = vadd.f32 0.0, %v676
        %v678 = vpop.f32.mrf.mxu0
        %v679 = vadd.f32 0.0, %v678
        %680 = vdwg.mxu0
        %p681 = scmp.eq.s32.totalorder %s28, 0
        // Predicated region
        $region41: #{tpu_custom_call.1} parent=35 // pred_check
          %p682 = pneg %p681
        $region42: #{tpu_custom_call.1} parent=35 // pred_check_branch
          %684 = sbr.rel (%p682) target = $region44
        $region43: #{tpu_custom_call.1} parent=35 // pred_region
          %685 = vst [vmem:[%s300] sm:$0xff] %v603
          %686 = vst [vmem:[%s300 + $0x8] sm:$0xff] %v605
          %687 = vst [vmem:[%s300 + $0x10] sm:$0xff] %v607
          %688 = vst [vmem:[%s300 + $0x18] sm:$0xff] %v609
          %689 = vst [vmem:[%s300 + $0x20] sm:$0xff] %v613
          %690 = vst [vmem:[%s300 + $0x28] sm:$0xff] %v615
          %691 = vst [vmem:[%s300 + $0x30] sm:$0xff] %v617
          %692 = vst [vmem:[%s300 + $0x38] sm:$0xff] %v619
          %693 = vst [vmem:[%s300 + $0x40] sm:$0xff] %v623
          %694 = vst [vmem:[%s300 + $0x48] sm:$0xff] %v625
          %695 = vst [vmem:[%s300 + $0x50] sm:$0xff] %v627
          %696 = vst [vmem:[%s300 + $0x58] sm:$0xff] %v629
          %697 = vst [vmem:[%s300 + $0x60] sm:$0xff] %v633
          %698 = vst [vmem:[%s300 + $0x68] sm:$0xff] %v635
          %699 = vst [vmem:[%s300 + $0x70] sm:$0xff] %v637
          %700 = vst [vmem:[%s300 + $0x78] sm:$0xff] %v639
          %701 = vst [vmem:[%s300 + $0x80] sm:$0xff] %v643
          %702 = vst [vmem:[%s300 + $0x88] sm:$0xff] %v645
          %703 = vst [vmem:[%s300 + $0x90] sm:$0xff] %v647
          %704 = vst [vmem:[%s300 + $0x98] sm:$0xff] %v649
          %705 = vst [vmem:[%s300 + $0xa0] sm:$0xff] %v653
          %706 = vst [vmem:[%s300 + $0xa8] sm:$0xff] %v655
          %707 = vst [vmem:[%s300 + $0xb0] sm:$0xff] %v657
          %708 = vst [vmem:[%s300 + $0xb8] sm:$0xff] %v659
          %709 = vst [vmem:[%s300 + $0xc0] sm:$0xff] %v663
          %710 = vst [vmem:[%s300 + $0xc8] sm:$0xff] %v665
          %711 = vst [vmem:[%s300 + $0xd0] sm:$0xff] %v667
          %712 = vst [vmem:[%s300 + $0xd8] sm:$0xff] %v669
          %713 = vst [vmem:[%s300 + $0xe0] sm:$0xff] %v673
          %714 = vst [vmem:[%s300 + $0xe8] sm:$0xff] %v675
          %715 = vst [vmem:[%s300 + $0xf0] sm:$0xff] %v677
          %716 = vst [vmem:[%s300 + $0xf8] sm:$0xff] %v679
        $region44: #{tpu_custom_call.1} parent=35 // pred_fallthru
          _
        %p717 = scmp.ne.s32.totalorder %s28, 0
        // Predicated region
        $region45: #{tpu_custom_call.1} parent=35 // pred_check
          %p718 = pneg %p717
        $region46: #{tpu_custom_call.1} parent=35 // pred_check_branch
          %720 = sbr.rel (%p718) target = $region48
        $region47: #{tpu_custom_call.1} parent=35 // pred_region
          %v721 = vld [vmem:[%s300] sm:$0xff]
          %v722 = vld [vmem:[%s300 + $0x8] sm:$0xff]
          %v723 = vld [vmem:[%s300 + $0x10] sm:$0xff]
          %v724 = vld [vmem:[%s300 + $0x18] sm:$0xff]
          %v725 = vld [vmem:[%s300 + $0x20] sm:$0xff]
          %v726 = vld [vmem:[%s300 + $0x28] sm:$0xff]
          %v727 = vld [vmem:[%s300 + $0x30] sm:$0xff]
          %v728 = vld [vmem:[%s300 + $0x38] sm:$0xff]
          %v729 = vld [vmem:[%s300 + $0x40] sm:$0xff]
          %v730 = vld [vmem:[%s300 + $0x48] sm:$0xff]
          %v731 = vld [vmem:[%s300 + $0x50] sm:$0xff]
          %v732 = vld [vmem:[%s300 + $0x58] sm:$0xff]
          %v733 = vld [vmem:[%s300 + $0x60] sm:$0xff]
          %v734 = vld [vmem:[%s300 + $0x68] sm:$0xff]
          %v735 = vld [vmem:[%s300 + $0x70] sm:$0xff]
          %v736 = vld [vmem:[%s300 + $0x78] sm:$0xff]
          %v737 = vld [vmem:[%s300 + $0x80] sm:$0xff]
          %v738 = vld [vmem:[%s300 + $0x88] sm:$0xff]
          %v739 = vld [vmem:[%s300 + $0x90] sm:$0xff]
          %v740 = vld [vmem:[%s300 + $0x98] sm:$0xff]
          %v741 = vld [vmem:[%s300 + $0xa0] sm:$0xff]
          %v742 = vld [vmem:[%s300 + $0xa8] sm:$0xff]
          %v743 = vld [vmem:[%s300 + $0xb0] sm:$0xff]
          %v744 = vld [vmem:[%s300 + $0xb8] sm:$0xff]
          %v745 = vld [vmem:[%s300 + $0xc0] sm:$0xff]
          %v746 = vld [vmem:[%s300 + $0xc8] sm:$0xff]
          %v747 = vld [vmem:[%s300 + $0xd0] sm:$0xff]
          %v748 = vld [vmem:[%s300 + $0xd8] sm:$0xff]
          %v749 = vld [vmem:[%s300 + $0xe0] sm:$0xff]
          %v750 = vld [vmem:[%s300 + $0xe8] sm:$0xff]
          %v751 = vld [vmem:[%s300 + $0xf0] sm:$0xff]
          %v752 = vld [vmem:[%s300 + $0xf8] sm:$0xff]
          %v753 = vadd.f32 %v721, %v603
          %v754 = vadd.f32 %v722, %v605
          %v755 = vadd.f32 %v723, %v607
          %v756 = vadd.f32 %v724, %v609
          %v757 = vadd.f32 %v725, %v613
          %v758 = vadd.f32 %v726, %v615
          %v759 = vadd.f32 %v727, %v617
          %v760 = vadd.f32 %v728, %v619
          %v761 = vadd.f32 %v729, %v623
          %v762 = vadd.f32 %v730, %v625
          %v763 = vadd.f32 %v731, %v627
          %v764 = vadd.f32 %v732, %v629
          %v765 = vadd.f32 %v733, %v633
          %v766 = vadd.f32 %v734, %v635
          %v767 = vadd.f32 %v735, %v637
          %v768 = vadd.f32 %v736, %v639
          %v769 = vadd.f32 %v737, %v643
          %v770 = vadd.f32 %v738, %v645
          %v771 = vadd.f32 %v739, %v647
          %v772 = vadd.f32 %v740, %v649
          %v773 = vadd.f32 %v741, %v653
          %v774 = vadd.f32 %v742, %v655
          %v775 = vadd.f32 %v743, %v657
          %v776 = vadd.f32 %v744, %v659
          %v777 = vadd.f32 %v745, %v663
          %v778 = vadd.f32 %v746, %v665
          %v779 = vadd.f32 %v747, %v667
          %v780 = vadd.f32 %v748, %v669
          %v781 = vadd.f32 %v749, %v673
          %v782 = vadd.f32 %v750, %v675
          %v783 = vadd.f32 %v751, %v677
          %v784 = vadd.f32 %v752, %v679
          %785 = vst [vmem:[%s300] sm:$0xff] %v753
          %786 = vst [vmem:[%s300 + $0x8] sm:$0xff] %v754
          %787 = vst [vmem:[%s300 + $0x10] sm:$0xff] %v755
          %788 = vst [vmem:[%s300 + $0x18] sm:$0xff] %v756
          %789 = vst [vmem:[%s300 + $0x20] sm:$0xff] %v757
          %790 = vst [vmem:[%s300 + $0x28] sm:$0xff] %v758
          %791 = vst [vmem:[%s300 + $0x30] sm:$0xff] %v759
          %792 = vst [vmem:[%s300 + $0x38] sm:$0xff] %v760
          %793 = vst [vmem:[%s300 + $0x40] sm:$0xff] %v761
          %794 = vst [vmem:[%s300 + $0x48] sm:$0xff] %v762
          %795 = vst [vmem:[%s300 + $0x50] sm:$0xff] %v763
          %796 = vst [vmem:[%s300 + $0x58] sm:$0xff] %v764
          %797 = vst [vmem:[%s300 + $0x60] sm:$0xff] %v765
          %798 = vst [vmem:[%s300 + $0x68] sm:$0xff] %v766
          %799 = vst [vmem:[%s300 + $0x70] sm:$0xff] %v767
          %800 = vst [vmem:[%s300 + $0x78] sm:$0xff] %v768
          %801 = vst [vmem:[%s300 + $0x80] sm:$0xff] %v769
          %802 = vst [vmem:[%s300 + $0x88] sm:$0xff] %v770
          %803 = vst [vmem:[%s300 + $0x90] sm:$0xff] %v771
          %804 = vst [vmem:[%s300 + $0x98] sm:$0xff] %v772
          %805 = vst [vmem:[%s300 + $0xa0] sm:$0xff] %v773
          %806 = vst [vmem:[%s300 + $0xa8] sm:$0xff] %v774
          %807 = vst [vmem:[%s300 + $0xb0] sm:$0xff] %v775
          %808 = vst [vmem:[%s300 + $0xb8] sm:$0xff] %v776
          %809 = vst [vmem:[%s300 + $0xc0] sm:$0xff] %v777
          %810 = vst [vmem:[%s300 + $0xc8] sm:$0xff] %v778
          %811 = vst [vmem:[%s300 + $0xd0] sm:$0xff] %v779
          %812 = vst [vmem:[%s300 + $0xd8] sm:$0xff] %v780
          %813 = vst [vmem:[%s300 + $0xe0] sm:$0xff] %v781
          %814 = vst [vmem:[%s300 + $0xe8] sm:$0xff] %v782
          %815 = vst [vmem:[%s300 + $0xf0] sm:$0xff] %v783
          %816 = vst [vmem:[%s300 + $0xf8] sm:$0xff] %v784
        $region48: #{tpu_custom_call.1} parent=35 // pred_fallthru
          _
        // Predicated region
        $region49: #{tpu_custom_call.1} parent=35 // pred_check
          %p817 = pneg %p681
        $region50: #{tpu_custom_call.1} parent=35 // pred_check_branch
          %819 = sbr.rel (%p817) target = $region52
        $region51: #{tpu_custom_call.1} parent=35 // pred_region
          %v820 = vld [vmem:[%s324] sm:$0xff]
          %v821 = vld [vmem:[%s324 + $0x8] sm:$0xff]
          %v822 = vld [vmem:[%s324 + $0x10] sm:$0xff]
          %v823 = vld [vmem:[%s324 + $0x18] sm:$0xff]
          %v824 = vld [vmem:[%s324 + $0x20] sm:$0xff]
          %v825 = vld [vmem:[%s324 + $0x28] sm:$0xff]
          %v826 = vld [vmem:[%s324 + $0x30] sm:$0xff]
          %v827 = vld [vmem:[%s324 + $0x38] sm:$0xff]
          %v828 = vld [vmem:[%s324 + $0x40] sm:$0xff]
          %v829 = vld [vmem:[%s324 + $0x48] sm:$0xff]
          %v830 = vld [vmem:[%s324 + $0x50] sm:$0xff]
          %v831 = vld [vmem:[%s324 + $0x58] sm:$0xff]
          %v832 = vld [vmem:[%s324 + $0x60] sm:$0xff]
          %v833 = vld [vmem:[%s324 + $0x68] sm:$0xff]
          %v834 = vld [vmem:[%s324 + $0x70] sm:$0xff]
          %v835 = vld [vmem:[%s324 + $0x78] sm:$0xff]
          %v836 = vmul.f32 %v820, 6.437752
          %v837 = vmul.f32 %v821, 6.437752
          %v838 = vmul.f32 %v822, 6.437752
          %v839 = vmul.f32 %v823, 6.437752
          %v840 = vmul.f32 %v824, 6.437752
          %v841 = vmul.f32 %v825, 6.437752
          %v842 = vmul.f32 %v826, 6.437752
          %v843 = vmul.f32 %v827, 6.437752
          %v844 = vmul.f32 %v828, 6.437752
          %v845 = vmul.f32 %v829, 6.437752
          %v846 = vmul.f32 %v830, 6.437752
          %v847 = vmul.f32 %v831, 6.437752
          %v848 = vmul.f32 %v832, 6.437752
          %v849 = vmul.f32 %v833, 6.437752
          %v850 = vmul.f32 %v834, 6.437752
          %v851 = vmul.f32 %v835, 6.437752
          %v852 = vmul.f32 %v836, 1.442695
          %v853 = vpow.pop %v852
          %v854 = vmul.f32 %v837, 1.442695
          %v855 = vpow.pop %v854
          %v856 = vmul.f32 %v838, 1.442695
          %v857 = vpow.pop %v856
          %v858 = vmul.f32 %v839, 1.442695
          %v859 = vpow.pop %v858
          %v860 = vmul.f32 %v840, 1.442695
          %v861 = vpow.pop %v860
          %v862 = vmul.f32 %v841, 1.442695
          %v863 = vpow.pop %v862
          %v864 = vmul.f32 %v842, 1.442695
          %v865 = vpow.pop %v864
          %v866 = vmul.f32 %v843, 1.442695
          %v867 = vpow.pop %v866
          %v868 = vmul.f32 %v844, 1.442695
          %v869 = vpow.pop %v868
          %v870 = vmul.f32 %v845, 1.442695
          %v871 = vpow.pop %v870
          %v872 = vmul.f32 %v846, 1.442695
          %v873 = vpow.pop %v872
          %v874 = vmul.f32 %v847, 1.442695
          %v875 = vpow.pop %v874
          %v876 = vmul.f32 %v848, 1.442695
          %v877 = vpow.pop %v876
          %v878 = vmul.f32 %v849, 1.442695
          %v879 = vpow.pop %v878
          %v880 = vmul.f32 %v850, 1.442695
          %v881 = vpow.pop %v880
          %v882 = vmul.f32 %v851, 1.442695
          %v883 = vpow.pop %v882
          %v884 = vsub.f32 %v853, 1.0
          %v885 = vsub.f32 %v855, 1.0
          %v886 = vsub.f32 %v857, 1.0
          %v887 = vsub.f32 %v859, 1.0
          %v888 = vsub.f32 %v861, 1.0
          %v889 = vsub.f32 %v863, 1.0
          %v890 = vsub.f32 %v865, 1.0
          %v891 = vsub.f32 %v867, 1.0
          %v892 = vsub.f32 %v869, 1.0
          %v893 = vsub.f32 %v871, 1.0
          %v894 = vsub.f32 %v873, 1.0
          %v895 = vsub.f32 %v875, 1.0
          %v896 = vsub.f32 %v877, 1.0
          %v897 = vsub.f32 %v879, 1.0
          %v898 = vsub.f32 %v881, 1.0
          %v899 = vsub.f32 %v883, 1.0
          %v900 = vrcp.pop 6.437752
          %v901 = vmul.f32 %v884, %v900
          %v902 = vmul.f32 %v885, %v900
          %v903 = vmul.f32 %v886, %v900
          %v904 = vmul.f32 %v887, %v900
          %v905 = vmul.f32 %v888, %v900
          %v906 = vmul.f32 %v889, %v900
          %v907 = vmul.f32 %v890, %v900
          %v908 = vmul.f32 %v891, %v900
          %v909 = vmul.f32 %v892, %v900
          %v910 = vmul.f32 %v893, %v900
          %v911 = vmul.f32 %v894, %v900
          %v912 = vmul.f32 %v895, %v900
          %v913 = vmul.f32 %v896, %v900
          %v914 = vmul.f32 %v897, %v900
          %v915 = vmul.f32 %v898, %v900
          %v916 = vmul.f32 %v899, %v900
          %v917 = vrsqrt.pop %v901
          %v918 = vrsqrt.pop %v902
          %v919 = vrsqrt.pop %v903
          %v920 = vrsqrt.pop %v904
          %v921 = vrsqrt.pop %v905
          %v922 = vrsqrt.pop %v906
          %v923 = vrsqrt.pop %v907
          %v924 = vrsqrt.pop %v908
          %v925 = vrsqrt.pop %v909
          %v926 = vrsqrt.pop %v910
          %v927 = vrsqrt.pop %v911
          %v928 = vrsqrt.pop %v912
          %v929 = vrsqrt.pop %v913
          %v930 = vrsqrt.pop %v914
          %v931 = vrsqrt.pop %v915
          %v932 = vrsqrt.pop %v916
          %v933 = vld [vmem:[%s300] sm:$0xff]
          %v934 = vld [vmem:[%s300 + $0x8] sm:$0xff]
          %v935 = vld [vmem:[%s300 + $0x10] sm:$0xff]
          %v936 = vld [vmem:[%s300 + $0x18] sm:$0xff]
          %v937 = vld [vmem:[%s300 + $0x20] sm:$0xff]
          %v938 = vld [vmem:[%s300 + $0x28] sm:$0xff]
          %v939 = vld [vmem:[%s300 + $0x30] sm:$0xff]
          %v940 = vld [vmem:[%s300 + $0x38] sm:$0xff]
          %v941 = vld [vmem:[%s300 + $0x40] sm:$0xff]
          %v942 = vld [vmem:[%s300 + $0x48] sm:$0xff]
          %v943 = vld [vmem:[%s300 + $0x50] sm:$0xff]
          %v944 = vld [vmem:[%s300 + $0x58] sm:$0xff]
          %v945 = vld [vmem:[%s300 + $0x60] sm:$0xff]
          %v946 = vld [vmem:[%s300 + $0x68] sm:$0xff]
          %v947 = vld [vmem:[%s300 + $0x70] sm:$0xff]
          %v948 = vld [vmem:[%s300 + $0x78] sm:$0xff]
          %v949 = vld [vmem:[%s300 + $0x80] sm:$0xff]
          %v950 = vld [vmem:[%s300 + $0x88] sm:$0xff]
          %v951 = vld [vmem:[%s300 + $0x90] sm:$0xff]
          %v952 = vld [vmem:[%s300 + $0x98] sm:$0xff]
          %v953 = vld [vmem:[%s300 + $0xa0] sm:$0xff]
          %v954 = vld [vmem:[%s300 + $0xa8] sm:$0xff]
          %v955 = vld [vmem:[%s300 + $0xb0] sm:$0xff]
          %v956 = vld [vmem:[%s300 + $0xb8] sm:$0xff]
          %v957 = vld [vmem:[%s300 + $0xc0] sm:$0xff]
          %v958 = vld [vmem:[%s300 + $0xc8] sm:$0xff]
          %v959 = vld [vmem:[%s300 + $0xd0] sm:$0xff]
          %v960 = vld [vmem:[%s300 + $0xd8] sm:$0xff]
          %v961 = vld [vmem:[%s300 + $0xe0] sm:$0xff]
          %v962 = vld [vmem:[%s300 + $0xe8] sm:$0xff]
          %v963 = vld [vmem:[%s300 + $0xf0] sm:$0xff]
          %v964 = vld [vmem:[%s300 + $0xf8] sm:$0xff]
          %v965 = vld [vmem:[%s318] sm:$0x3]
          %v967 = vlaneseq
          %v968 = vshrl.u32 %v967, 7
          %v969 = vsub.s32 0, %v968
          %v970 = vrot.slane %v965, %v969
          %v971 = vlaneseq
          %v972 = vshrl.u32 %v971, 7
          %v973 = vsub.s32 1, %v972
          %v974 = vrot.slane %v965, %v973
          %v977 = vadd.f32 %v933, %v970
          %v978 = vadd.f32 %v934, %v974
          %v979 = vadd.f32 %v935, %v970
          %v980 = vadd.f32 %v936, %v974
          %v981 = vadd.f32 %v937, %v970
          %v982 = vadd.f32 %v938, %v974
          %v983 = vadd.f32 %v939, %v970
          %v984 = vadd.f32 %v940, %v974
          %v985 = vadd.f32 %v941, %v970
          %v986 = vadd.f32 %v942, %v974
          %v987 = vadd.f32 %v943, %v970
          %v988 = vadd.f32 %v944, %v974
          %v989 = vadd.f32 %v945, %v970
          %v990 = vadd.f32 %v946, %v974
          %v991 = vadd.f32 %v947, %v970
          %v992 = vadd.f32 %v948, %v974
          %v993 = vadd.f32 %v949, %v970
          %v994 = vadd.f32 %v950, %v974
          %v995 = vadd.f32 %v951, %v970
          %v996 = vadd.f32 %v952, %v974
          %v997 = vadd.f32 %v953, %v970
          %v998 = vadd.f32 %v954, %v974
          %v999 = vadd.f32 %v955, %v970
          %v1000 = vadd.f32 %v956, %v974
          %v1001 = vadd.f32 %v957, %v970
          %v1002 = vadd.f32 %v958, %v974
          %v1003 = vadd.f32 %v959, %v970
          %v1004 = vadd.f32 %v960, %v974
          %v1005 = vadd.f32 %v961, %v970
          %v1006 = vadd.f32 %v962, %v974
          %v1007 = vadd.f32 %v963, %v970
          %v1008 = vadd.f32 %v964, %v974
          %1010 = vset.pattern.permute.xlu0 0
          %1011 = vperm.xlu0 %1010, %v917
          %v1012 = vpop.permute.xlu0 %1011
          %1015 = vset.pattern.permute.xlu0 0
          %1016 = vperm.xlu0 %1015, %v918
          %v1017 = vpop.permute.xlu0 %1016
          %1020 = vset.pattern.permute.xlu0 0
          %1021 = vperm.xlu0 %1020, %v919
          %v1022 = vpop.permute.xlu0 %1021
          %1025 = vset.pattern.permute.xlu0 0
          %1026 = vperm.xlu0 %1025, %v920
          %v1027 = vpop.permute.xlu0 %1026
          %1030 = vset.pattern.permute.xlu0 0
          %1031 = vperm.xlu0 %1030, %v921
          %v1032 = vpop.permute.xlu0 %1031
          %1035 = vset.pattern.permute.xlu0 0
          %1036 = vperm.xlu0 %1035, %v922
          %v1037 = vpop.permute.xlu0 %1036
          %1040 = vset.pattern.permute.xlu0 0
          %1041 = vperm.xlu0 %1040, %v923
          %v1042 = vpop.permute.xlu0 %1041
          %1045 = vset.pattern.permute.xlu0 0
          %1046 = vperm.xlu0 %1045, %v924
          %v1047 = vpop.permute.xlu0 %1046
          %1050 = vset.pattern.permute.xlu0 0
          %1051 = vperm.xlu0 %1050, %v925
          %v1052 = vpop.permute.xlu0 %1051
          %1055 = vset.pattern.permute.xlu0 0
          %1056 = vperm.xlu0 %1055, %v926
          %v1057 = vpop.permute.xlu0 %1056
          %1060 = vset.pattern.permute.xlu0 0
          %1061 = vperm.xlu0 %1060, %v927
          %v1062 = vpop.permute.xlu0 %1061
          %1065 = vset.pattern.permute.xlu0 0
          %1066 = vperm.xlu0 %1065, %v928
          %v1067 = vpop.permute.xlu0 %1066
          %1070 = vset.pattern.permute.xlu0 0
          %1071 = vperm.xlu0 %1070, %v929
          %v1072 = vpop.permute.xlu0 %1071
          %1075 = vset.pattern.permute.xlu0 0
          %1076 = vperm.xlu0 %1075, %v930
          %v1077 = vpop.permute.xlu0 %1076
          %1080 = vset.pattern.permute.xlu0 0
          %1081 = vperm.xlu0 %1080, %v931
          %v1082 = vpop.permute.xlu0 %1081
          %1085 = vset.pattern.permute.xlu0 0
          %1086 = vperm.xlu0 %1085, %v932
          %v1087 = vpop.permute.xlu0 %1086
          %v1089 = vmul.f32 %v977, %v1012
          %v1090 = vmul.f32 %v978, %v1012
          %v1091 = vmul.f32 %v979, %v1017
          %v1092 = vmul.f32 %v980, %v1017
          %v1093 = vmul.f32 %v981, %v1022
          %v1094 = vmul.f32 %v982, %v1022
          %v1095 = vmul.f32 %v983, %v1027
          %v1096 = vmul.f32 %v984, %v1027
          %v1097 = vmul.f32 %v985, %v1032
          %v1098 = vmul.f32 %v986, %v1032
          %v1099 = vmul.f32 %v987, %v1037
          %v1100 = vmul.f32 %v988, %v1037
          %v1101 = vmul.f32 %v989, %v1042
          %v1102 = vmul.f32 %v990, %v1042
          %v1103 = vmul.f32 %v991, %v1047
          %v1104 = vmul.f32 %v992, %v1047
          %v1105 = vmul.f32 %v993, %v1052
          %v1106 = vmul.f32 %v994, %v1052
          %v1107 = vmul.f32 %v995, %v1057
          %v1108 = vmul.f32 %v996, %v1057
          %v1109 = vmul.f32 %v997, %v1062
          %v1110 = vmul.f32 %v998, %v1062
          %v1111 = vmul.f32 %v999, %v1067
          %v1112 = vmul.f32 %v1000, %v1067
          %v1113 = vmul.f32 %v1001, %v1072
          %v1114 = vmul.f32 %v1002, %v1072
          %v1115 = vmul.f32 %v1003, %v1077
          %v1116 = vmul.f32 %v1004, %v1077
          %v1117 = vmul.f32 %v1005, %v1082
          %v1118 = vmul.f32 %v1006, %v1082
          %v1119 = vmul.f32 %v1007, %v1087
          %v1120 = vmul.f32 %v1008, %v1087
          %1121 = vst [vmem:[%s300] sm:$0xff] %v1089
          %1122 = vst [vmem:[%s300 + $0x8] sm:$0xff] %v1090
          %1123 = vst [vmem:[%s300 + $0x10] sm:$0xff] %v1091
          %1124 = vst [vmem:[%s300 + $0x18] sm:$0xff] %v1092
          %1125 = vst [vmem:[%s300 + $0x20] sm:$0xff] %v1093
          %1126 = vst [vmem:[%s300 + $0x28] sm:$0xff] %v1094
          %1127 = vst [vmem:[%s300 + $0x30] sm:$0xff] %v1095
          %1128 = vst [vmem:[%s300 + $0x38] sm:$0xff] %v1096
          %1129 = vst [vmem:[%s300 + $0x40] sm:$0xff] %v1097
          %1130 = vst [vmem:[%s300 + $0x48] sm:$0xff] %v1098
          %1131 = vst [vmem:[%s300 + $0x50] sm:$0xff] %v1099
          %1132 = vst [vmem:[%s300 + $0x58] sm:$0xff] %v1100
          %1133 = vst [vmem:[%s300 + $0x60] sm:$0xff] %v1101
          %1134 = vst [vmem:[%s300 + $0x68] sm:$0xff] %v1102
          %1135 = vst [vmem:[%s300 + $0x70] sm:$0xff] %v1103
          %1136 = vst [vmem:[%s300 + $0x78] sm:$0xff] %v1104
          %1137 = vst [vmem:[%s300 + $0x80] sm:$0xff] %v1105
          %1138 = vst [vmem:[%s300 + $0x88] sm:$0xff] %v1106
          %1139 = vst [vmem:[%s300 + $0x90] sm:$0xff] %v1107
          %1140 = vst [vmem:[%s300 + $0x98] sm:$0xff] %v1108
          %1141 = vst [vmem:[%s300 + $0xa0] sm:$0xff] %v1109
          %1142 = vst [vmem:[%s300 + $0xa8] sm:$0xff] %v1110
          %1143 = vst [vmem:[%s300 + $0xb0] sm:$0xff] %v1111
          %1144 = vst [vmem:[%s300 + $0xb8] sm:$0xff] %v1112
          %1145 = vst [vmem:[%s300 + $0xc0] sm:$0xff] %v1113
          %1146 = vst [vmem:[%s300 + $0xc8] sm:$0xff] %v1114
          %1147 = vst [vmem:[%s300 + $0xd0] sm:$0xff] %v1115
          %1148 = vst [vmem:[%s300 + $0xd8] sm:$0xff] %v1116
          %1149 = vst [vmem:[%s300 + $0xe0] sm:$0xff] %v1117
          %1150 = vst [vmem:[%s300 + $0xe8] sm:$0xff] %v1118
          %1151 = vst [vmem:[%s300 + $0xf0] sm:$0xff] %v1119
          %1152 = vst [vmem:[%s300 + $0xf8] sm:$0xff] %v1120
        $region52: #{tpu_custom_call.1} parent=35 // pred_fallthru
          _
        %s1153 = sand.u32 %s158, 1
        %s1154 = scalar_lea.sflag [#allocation4], %s1153
        %s1155 = sand.u32 %s158, 1
        %s1156 = smul.addr %s1155, 256
        %s1157 = scalar_lea.vmem [#allocation5], %s1156
        // Predicated region
        $region53: #{tpu_custom_call.1} parent=35 // pred_check
          %p1158 = pneg %p168
        $region54: #{tpu_custom_call.1} parent=35 // pred_check_branch
          %1160 = sbr.rel (%p1158) target = $region56
        $region55: #{tpu_custom_call.1} parent=35 // pred_region
          %s1161 = smul.u32 16, %s26
          %s1162 = smul.u32 2, %s27
          %s1164 = ssub.s32 4096, 4096
          %1165 = vsyncadd %s1154, %s1164
          %s1166 = smul.addr %s1161, 2
          %s1167 = sadd.s32 %s1162, %s1166
          %s1168 = smul.addr %s1167, 128
          %s1169 = scalar_lea.hbm %s4, %s1168
          %s1170 = sshll.u32 %s1157, 4
          %s1171 = int_to_ptr.vmem [resolvable:$true] %s1170
          %1176 = dma.vmem_to_hbm [thread:$0]  %s1171, 4096, %s1169, %s1154, 256, 256, 16
        $region56: #{tpu_custom_call.1} parent=35 // pred_fallthru
          _
      $region36: #{tpu_custom_call.1} parent=5 // pred_fallthru
        _
      %p1177 = scmp.le.s32.totalorder 2, %s16
      // Predicated region
      $region57: #{tpu_custom_call.1} parent=5 // pred_check
        %p1178 = pneg %p1177
      $region58: #{tpu_custom_call.1} parent=5 // pred_check_branch
        %1180 = sbr.rel (%p1178) target = $region60
      $region59: #{tpu_custom_call.1} parent=5 // pred_region
        %s1181 = ssub.s32 %s16, 2
        // Predicated region
        $region61: #{tpu_custom_call.1} parent=59 // pred_check
          %p1182 = pneg %p174
        $region62: #{tpu_custom_call.1} parent=59 // pred_check_branch
          %1184 = sbr.rel (%p1182) target = $region64
        $region63: #{tpu_custom_call.1} parent=59 // pred_region
          %s1185 = sand.u32 %s159, 1
          %s1186 = scalar_lea.sflag [#allocation4], %s1185
          %s1187 = sand.u32 %s159, 1
          %s1188 = smul.addr %s1187, 256
          %s1189 = scalar_lea.vmem [#allocation5], %s1188
          %1190 = dma.done %s1186, 4096
        $region64: #{tpu_custom_call.1} parent=59 // pred_fallthru
          _
      $region60: #{tpu_custom_call.1} parent=5 // pred_fallthru
        _
    $region6: #{tpu_custom_call.1} parent=1 // loop_footer
      %s20 = sadd.s32 1, %s16
    $region7: #{tpu_custom_call.1} parent=1 // loop_footer_branch
      %15 = sbr.rel target = $region3
    $region8: #{tpu_custom_call.1} parent=1 // loop_exit
      _
    %1191 = vsyncpa [#allocation3], 1
    %s1192 = scalar_lea.sflag [#allocation3], 1
    %1193 = vsyncpa %s1192, 1
    %1194 = vsyncpa [#allocation4], 1
    %s1195 = scalar_lea.sflag [#allocation4], 1
    %1196 = vsyncpa %s1195, 1

</llo_original>
